<compile_context>
chip_gen: v5e
topology: v5e:2x2
jax: 0.10.0
libtpu: 0.0.40
codegen_flags: <defaults>
</compile_context>

<pallas_src>
import functools

import jax
import jax.numpy as jnp
from jax.experimental import pallas as pl
from jax.experimental.pallas import tpu as pltpu


# Leading "parallel" grid splits. v7x has 2 TensorCores per chip; on v5e/v6e
# (1 TC) the extra split just runs serially and is essentially free.
_NUM_CORE_SPLITS = 2

# Upper bound on rows per grid step (bounds per-step latency / accumulator
# size even for tiny widths).
_MAX_ROW_TILE = 2048


def _round_up(x, m):
    return ((x + m - 1) // m) * m


def _vmem_budgets():
    """Return (pipeline_budget_bytes, vmem_limit_bytes) per TPU generation."""
    try:
        cap = int(pltpu.get_tpu_info().vmem_capacity_bytes)
    except Exception:
        cap = 64 * 1024 * 1024          # conservative fallback: v7x per-core VMEM
    # Scoped VMEM limit we request from the compiler (well under physical).
    limit = min(int(cap * 3 // 4), 112 * 1024 * 1024)
    limit = max(limit, 32 * 1024 * 1024)
    # Budget for double-buffered inputs + f32 accumulator scratch.
    pipeline = max(8 * 1024 * 1024, limit - 16 * 1024 * 1024)
    return pipeline, limit


def _plan_row_tiling(n_rows, width, in_itemsize, pipeline_budget):
    """Pick (row_tile, inner_grid, padded_rows) for a (n_rows, width) slab."""
    n8 = _round_up(max(int(n_rows), 1), 8)
    # Live VMEM per tile row: 2 operands x 2 pipeline buffers (input dtype)
    # plus one f32 accumulator row.
    bytes_per_row = width * (4 * in_itemsize + 4)
    tile_cap = (pipeline_budget // bytes_per_row) // 8 * 8
    tile_cap = max(8, min(_MAX_ROW_TILE, tile_cap))
    tile_cap = min(tile_cap, n8)
    blocks = _round_up(-(-n8 // tile_cap), _NUM_CORE_SPLITS)
    tile = _round_up(-(-n8 // blocks), 8)
    padded_rows = blocks * tile
    return tile, blocks // _NUM_CORE_SPLITS, padded_rows


def _pad_rows(x, padded_rows):
    n = x.shape[0]
    if padded_rows == n:
        return x
    return jnp.pad(x, ((0, padded_rows - n), (0, 0)))   # zero rows are inert


# ----------------------------------------------------------------------------
# Kernel 1: softened-KL sum.  Accumulates element-wise p_T*(log p_T - log p_S)
# into an f32 VMEM scratch; one cross-lane reduce at the end per core split.
# The batchmean division and T**2 scaling are applied in the wrapper.
# ----------------------------------------------------------------------------
def _kl_sum_kernel(s_ref, t_ref, o_ref, acc_ref, *, inv_temperature):
    @pl.when(pl.program_id(1) == 0)
    def _init():
        acc_ref[...] = jnp.zeros_like(acc_ref)

    s = s_ref[...].astype(jnp.float32) * inv_temperature
    t = t_ref[...].astype(jnp.float32) * inv_temperature

    # Numerically stable log-softmax / softmax.
    s_shift = s - jnp.max(s, axis=-1, keepdims=True)
    t_shift = t - jnp.max(t, axis=-1, keepdims=True)
    e_s = jnp.exp(s_shift)
    e_t = jnp.exp(t_shift)
    s_sum = jnp.sum(e_s, axis=-1, keepdims=True)
    t_sum = jnp.sum(e_t, axis=-1, keepdims=True)

    s_logp = s_shift - jnp.log(s_sum)
    t_logp = t_shift - jnp.log(t_sum)
    # Exact reciprocal: operates on a (tile, 1) column only (off the
    # element-wise critical path), keeps teacher probs bit-accurate.
    t_p = e_t * pl.reciprocal(t_sum, approx=False)

    acc_ref[...] += t_p * (t_logp - s_logp)          # pure VPU accumulate

    @pl.when(pl.program_id(1) == pl.num_programs(1) - 1)
    def _fini():
        total = jnp.sum(acc_ref[...])                # single final reduce
        o_ref[...] = jnp.full(o_ref.shape, total, o_ref.dtype)


def kl_div_batchmean(student_logits, teacher_logits, temperature):
    """KL(teacher || student) on temperature-softened logits, 'batchmean'."""
    batch = student_logits.shape[0]
    vocab = student_logits.shape[-1]
    # Keep original dtype (bf16 stays bf16 through the DMA).
    s2d = student_logits.reshape(-1, vocab)
    t2d = teacher_logits.reshape(-1, vocab)
    n_rows = s2d.shape[0]

    pipeline_budget, vmem_limit = _vmem_budgets()
    itemsize = max(s2d.dtype.itemsize, t2d.dtype.itemsize)
    tile, grid_inner, padded_rows = _plan_row_tiling(
        n_rows, vocab, itemsize, pipeline_budget)
    s2d = _pad_rows(s2d, padded_rows)
    t2d = _pad_rows(t2d, padded_rows)

    cost = pl.CostEstimate(
        flops=int(10 * padded_rows * vocab),
        transcendentals=int(2 * padded_rows * vocab + 3 * padded_rows),
        bytes_accessed=int(padded_rows * vocab *
                           (s2d.dtype.itemsize + t2d.dtype.itemsize)))

    partials = pl.pallas_call(
        functools.partial(_kl_sum_kernel,
                          inv_temperature=1.0 / float(temperature)),
        out_shape=jax.ShapeDtypeStruct((_NUM_CORE_SPLITS * 8, 128), jnp.float32),
        grid_spec=pltpu.PrefetchScalarGridSpec(
            num_scalar_prefetch=0,
            grid=(_NUM_CORE_SPLITS, grid_inner),
            in_specs=[
                pl.BlockSpec((tile, vocab), lambda c, i: (c * grid_inner + i, 0)),
                pl.BlockSpec((tile, vocab), lambda c, i: (c * grid_inner + i, 0)),
            ],
            out_specs=pl.BlockSpec((8, 128), lambda c, i: (c, 0)),
            scratch_shapes=[pltpu.VMEM((tile, vocab), jnp.float32)],
        ),
        compiler_params=pltpu.CompilerParams(
            dimension_semantics=("parallel", "arbitrary"),
            vmem_limit_bytes=vmem_limit),
        cost_estimate=cost,
    )(s2d, t2d)

    # Each per-core (8,128) block is filled with that core's partial sum.
    kl_sum = jnp.sum(partials[::8, 0])
    return kl_sum / jnp.float32(batch)


# ----------------------------------------------------------------------------
# Kernel 2: MSE sum.  Same accumulate-then-reduce-once structure.
# Mean division happens in the wrapper.
# ----------------------------------------------------------------------------
def _mse_sum_kernel(s_ref, t_ref, o_ref, acc_ref):
    @pl.when(pl.program_id(1) == 0)
    def _init():
        acc_ref[...] = jnp.zeros_like(acc_ref)

    d = s_ref[...].astype(jnp.float32) - t_ref[...].astype(jnp.float32)
    acc_ref[...] += d * d

    @pl.when(pl.program_id(1) == pl.num_programs(1) - 1)
    def _fini():
        total = jnp.sum(acc_ref[...])
        o_ref[...] = jnp.full(o_ref.shape, total, o_ref.dtype)


def mse_loss(student_feat, teacher_feat):
    hidden = student_feat.shape[-1]
    s2d = student_feat.reshape(-1, hidden)
    t2d = teacher_feat.reshape(-1, hidden)
    n_rows = s2d.shape[0]
    numel = s2d.size

    pipeline_budget, vmem_limit = _vmem_budgets()
    itemsize = max(s2d.dtype.itemsize, t2d.dtype.itemsize)
    tile, grid_inner, padded_rows = _plan_row_tiling(
        n_rows, hidden, itemsize, pipeline_budget)
    s2d = _pad_rows(s2d, padded_rows)
    t2d = _pad_rows(t2d, padded_rows)

    cost = pl.CostEstimate(
        flops=int(3 * padded_rows * hidden),
        transcendentals=0,
        bytes_accessed=int(padded_rows * hidden *
                           (s2d.dtype.itemsize + t2d.dtype.itemsize)))

    partials = pl.pallas_call(
        _mse_sum_kernel,
        out_shape=jax.ShapeDtypeStruct((_NUM_CORE_SPLITS * 8, 128), jnp.float32),
        grid_spec=pltpu.PrefetchScalarGridSpec(
            num_scalar_prefetch=0,
            grid=(_NUM_CORE_SPLITS, grid_inner),
            in_specs=[
                pl.BlockSpec((tile, hidden), lambda c, i: (c * grid_inner + i, 0)),
                pl.BlockSpec((tile, hidden), lambda c, i: (c * grid_inner + i, 0)),
            ],
            out_specs=pl.BlockSpec((8, 128), lambda c, i: (c, 0)),
            scratch_shapes=[pltpu.VMEM((tile, hidden), jnp.float32)],
        ),
        compiler_params=pltpu.CompilerParams(
            dimension_semantics=("parallel", "arbitrary"),
            vmem_limit_bytes=vmem_limit),
        cost_estimate=cost,
    )(s2d, t2d)

    sq_sum = jnp.sum(partials[::8, 0])
    return sq_sum / jnp.float32(numel)


# ----------------------------------------------------------------------------
# Module-equivalent wrapper
# ----------------------------------------------------------------------------
class PELAFeatureDistillationLoss:
    def __init__(self, alpha=0.5, temperature=4.0, feature_layers=None):
        self.alpha = alpha  # unused in forward (mirrors the PyTorch module)
        self.temperature = temperature
        self.feature_layers = feature_layers or [-1]

    def __call__(self, student_logits, teacher_logits,
                 student_features=None, teacher_features=None):
        total_loss = jnp.float32(0.0)
        loss_count = 0

        if student_logits is not None and teacher_logits is not None:
            kl = kl_div_batchmean(student_logits, teacher_logits,
                                  self.temperature)
            total_loss = total_loss + kl * jnp.float32(self.temperature ** 2)
            loss_count += 1

        if student_features and teacher_features:
            for layer_idx in self.feature_layers:
                if layer_idx in student_features and layer_idx in teacher_features:
                    total_loss = total_loss + mse_loss(
                        student_features[layer_idx],
                        teacher_features[layer_idx])
                    loss_count += 1

        return total_loss / jnp.float32(max(loss_count, 1))


# ----------------------------------------------------------------------------
# Pure-JAX reference for a sanity check.
# ----------------------------------------------------------------------------
def _reference(student_logits, teacher_logits, s_feat, t_feat, T):
    s = student_logits.astype(jnp.float32) / T
    t = teacher_logits.astype(jnp.float32) / T
    s_logp = jax.nn.log_softmax(s, axis=-1)
    t_p = jax.nn.softmax(t, axis=-1)
    t_logp = jax.nn.log_softmax(t, axis=-1)
    kl = jnp.sum(t_p * (t_logp - s_logp)) / student_logits.shape[0]
    mse = jnp.mean((s_feat.astype(jnp.float32) - t_feat.astype(jnp.float32)) ** 2)
    return (kl * T ** 2 + mse) / 2.0


if __name__ == "__main__":
    key = jax.random.PRNGKey(0)
    k1, k2, k3, k4 = jax.random.split(key, 4)

    B, S, V, H = 2, 8, 128, 32
    student_logits = jax.random.normal(k1, (B, S, V), dtype=jnp.float32)
    teacher_logits = jax.random.normal(k2, (B, S, V), dtype=jnp.float32)
    student_feat = jax.random.normal(k3, (B, S, H), dtype=jnp.float32)
    teacher_feat = jax.random.normal(k4, (B, S, H), dtype=jnp.float32)

    loss_fn = PELAFeatureDistillationLoss(alpha=0.5, temperature=4.0,
                                          feature_layers=[-1])
    out = loss_fn(student_logits, teacher_logits,
                  student_features={-1: student_feat},
                  teacher_features={-1: teacher_feat})
    out = jax.block_until_ready(out)

    ref = _reference(student_logits, teacher_logits, student_feat,
                     teacher_feat, 4.0)
    assert jnp.allclose(out, ref, rtol=1e-5, atol=1e-5), (out, ref)

    print("KERNEL_OK")
</pallas_src>

<mosaic_0001>
module attributes {stable_mosaic.version = 11 : i64} {
  func.func @_kl_sum_kernel(%arg0: i32, %arg1: i32, %arg2: memref<8x128xf32, #tpu.memory_space<vmem>>, %arg3: memref<8x128xf32, #tpu.memory_space<vmem>>, %arg4: memref<8x128xf32, #tpu.memory_space<vmem>>, %arg5: memref<8x128xf32, #tpu.memory_space<vmem>>) attributes {dimension_semantics = [#tpu.dimension_semantics<parallel>, #tpu.dimension_semantics<arbitrary>], iteration_bounds = array<i64: 2, 1>, scalar_prefetch = 0 : i64, scratch_operands = 1 : i64, tpu.core_type = #tpu.core_type<tc>, window_params = [{transform_indices = @transform_0, window_bounds = array<i64: 8, 128>}, {transform_indices = @transform_1, window_bounds = array<i64: 8, 128>}, {transform_indices = @transform_2, window_bounds = array<i64: 8, 128>}]} {
    %c0_i32 = arith.constant 0 : i32
    %0 = arith.cmpi eq, %arg1, %c0_i32 : i32
    %1 = arith.extui %0 : i1 to i32
    %c0_i32_0 = arith.constant 0 : i32
    %2 = arith.cmpi ne, %1, %c0_i32_0 : i32
    scf.if %2 {
      %cst_15 = arith.constant 0.000000e+00 : f32
      %40 = vector.broadcast %cst_15 : f32 to vector<8x128xf32>
      %c0_16 = arith.constant 0 : index
      %c0_17 = arith.constant 0 : index
      %41 = vector.load %arg5[%c0_16, %c0_17] : memref<8x128xf32, #tpu.memory_space<vmem>>, vector<8x128xf32>
      tpu.vector_store %arg5[%c0_16, %c0_17], %40 {strides = array<i32>} : memref<8x128xf32, #tpu.memory_space<vmem>>, vector<8x128xf32>,
    } else {
    }
    %c0 = arith.constant 0 : index
    %c0_1 = arith.constant 0 : index
    %3 = vector.load %arg2[%c0, %c0_1] : memref<8x128xf32, #tpu.memory_space<vmem>>, vector<8x128xf32>
    %cst = arith.constant 2.500000e-01 : f32
    %4 = vector.broadcast %cst : f32 to vector<8x128xf32>
    %5 = arith.mulf %3, %4 : vector<8x128xf32>
    %c0_2 = arith.constant 0 : index
    %c0_3 = arith.constant 0 : index
    %6 = vector.load %arg3[%c0_2, %c0_3] : memref<8x128xf32, #tpu.memory_space<vmem>>, vector<8x128xf32>
    %cst_4 = arith.constant 2.500000e-01 : f32
    %7 = vector.broadcast %cst_4 : f32 to vector<8x128xf32>
    %8 = arith.mulf %6, %7 : vector<8x128xf32>
    %cst_5 = arith.constant dense<0xFF800000> : vector<8xf32>
    %9 = vector.multi_reduction <maximumf>, %5, %cst_5 [1] : vector<8x128xf32> to vector<8xf32>
    %10 = vector.shape_cast %9 : vector<8xf32> to vector<8x1xf32>
    %11 = vector.broadcast %10 : vector<8x1xf32> to vector<8x128xf32>
    %12 = arith.subf %5, %11 : vector<8x128xf32>
    %cst_6 = arith.constant dense<0xFF800000> : vector<8xf32>
    %13 = vector.multi_reduction <maximumf>, %8, %cst_6 [1] : vector<8x128xf32> to vector<8xf32>
    %14 = vector.shape_cast %13 : vector<8xf32> to vector<8x1xf32>
    %15 = vector.broadcast %14 : vector<8x1xf32> to vector<8x128xf32>
    %16 = arith.subf %8, %15 : vector<8x128xf32>
    %17 = math.exp %12 : vector<8x128xf32>
    %18 = math.exp %16 : vector<8x128xf32>
    %cst_7 = arith.constant dense<0.000000e+00> : vector<8xf32>
    %19 = vector.multi_reduction <add>, %17, %cst_7 [1] : vector<8x128xf32> to vector<8xf32>
    %20 = vector.shape_cast %19 : vector<8xf32> to vector<8x1xf32>
    %cst_8 = arith.constant dense<0.000000e+00> : vector<8xf32>
    %21 = vector.multi_reduction <add>, %18, %cst_8 [1] : vector<8x128xf32> to vector<8xf32>
    %22 = vector.shape_cast %21 : vector<8xf32> to vector<8x1xf32>
    %23 = math.log %20 : vector<8x1xf32>
    %24 = vector.broadcast %23 : vector<8x1xf32> to vector<8x128xf32>
    %25 = arith.subf %12, %24 : vector<8x128xf32>
    %26 = math.log %22 : vector<8x1xf32>
    %27 = vector.broadcast %26 : vector<8x1xf32> to vector<8x128xf32>
    %28 = arith.subf %16, %27 : vector<8x128xf32>
    %29 = tpu.reciprocal %22 : vector<8x1xf32> -> vector<8x1xf32>
    %30 = vector.broadcast %29 : vector<8x1xf32> to vector<8x128xf32>
    %31 = arith.mulf %18, %30 : vector<8x128xf32>
    %c0_9 = arith.constant 0 : index
    %c0_10 = arith.constant 0 : index
    %32 = vector.load %arg5[%c0_9, %c0_10] : memref<8x128xf32, #tpu.memory_space<vmem>>, vector<8x128xf32>
    %33 = arith.subf %28, %25 : vector<8x128xf32>
    %34 = arith.mulf %31, %33 : vector<8x128xf32>
    %35 = arith.addf %32, %34 : vector<8x128xf32>
    %c0_11 = arith.constant 0 : index
    %c0_12 = arith.constant 0 : index
    %36 = vector.load %arg5[%c0_11, %c0_12] : memref<8x128xf32, #tpu.memory_space<vmem>>, vector<8x128xf32>
    tpu.vector_store %arg5[%c0_11, %c0_12], %35 {strides = array<i32>} : memref<8x128xf32, #tpu.memory_space<vmem>>, vector<8x128xf32>,
    %c0_i32_13 = arith.constant 0 : i32
    %37 = arith.cmpi eq, %arg1, %c0_i32_13 : i32
    %38 = arith.extui %37 : i1 to i32
    %c0_i32_14 = arith.constant 0 : i32
    %39 = arith.cmpi ne, %38, %c0_i32_14 : i32
    scf.if %39 {
      %c0_15 = arith.constant 0 : index
      %c0_16 = arith.constant 0 : index
      %40 = vector.load %arg5[%c0_15, %c0_16] : memref<8x128xf32, #tpu.memory_space<vmem>>, vector<8x128xf32>
      %41 = vector.shape_cast %40 : vector<8x128xf32> to vector<1x8x128xf32>
      %cst_17 = arith.constant dense<0.000000e+00> : vector<1xf32>
      %42 = vector.multi_reduction <add>, %41, %cst_17 [1, 2] : vector<1x8x128xf32> to vector<1xf32>
      %43 = vector.shape_cast %42 : vector<1xf32> to vector<1x1x1xf32>
      %44 = vector.extract %43[0, 0, 0] : f32 from vector<1x1x1xf32>
      %45 = vector.broadcast %44 : f32 to vector<8x128xf32>
      %c0_18 = arith.constant 0 : index
      %c0_19 = arith.constant 0 : index
      %46 = vector.load %arg4[%c0_18, %c0_19] : memref<8x128xf32, #tpu.memory_space<vmem>>, vector<8x128xf32>
      tpu.vector_store %arg4[%c0_18, %c0_19], %45 {strides = array<i32>} : memref<8x128xf32, #tpu.memory_space<vmem>>, vector<8x128xf32>,
    } else {
    }
    return
  }
  func.func @transform_0(%arg0: i32, %arg1: i32) -> (i32, i32) {
    %c1_i32 = arith.constant 1 : i32
    %0 = arith.muli %arg0, %c1_i32 : i32
    %1 = arith.addi %0, %arg1 : i32
    %c0_i32 = arith.constant 0 : i32
    %c0_i32_0 = arith.constant 0 : i32
    return %1, %c0_i32 : i32, i32
  }
  func.func @transform_1(%arg0: i32, %arg1: i32) -> (i32, i32) {
    %c1_i32 = arith.constant 1 : i32
    %0 = arith.muli %arg0, %c1_i32 : i32
    %1 = arith.addi %0, %arg1 : i32
    %c0_i32 = arith.constant 0 : i32
    %c0_i32_0 = arith.constant 0 : i32
    return %1, %c0_i32 : i32, i32
  }
  func.func @transform_2(%arg0: i32, %arg1: i32) -> (i32, i32) {
    %c0_i32 = arith.constant 0 : i32
    %c0_i32_0 = arith.constant 0 : i32
    return %arg0, %c0_i32 : i32, i32
  }
}

</mosaic_0001>

<llo_original>
// kernel: tpu_custom_call.1
$region0: #{tpu_custom_call.1}
  #allocation0 [shape = 'u32[]', space=smem, size = 0x4, offset = 0x4, fixed_abs, tag = 'smem constant byte address 0x4 - core index']
  #allocation1 [shape = 'u32[72,128]{1,0:T(1,128)}', space=vmem, size = 0x9000, scoped, tag = 'internal scratch']
  #allocation2 [shape = 'f32[8,128]{1,0:T(8,128)}', space=vmem, size = 0x1000, scoped, tag = 'scratch operand']
  %s0 = inlined_call_operand.hbm [shape: f32[16,128], index: 0, kind: input, shape index: {}]
  %s1 = inlined_call_operand.hbm [shape: f32[16,128], index: 1, kind: input, shape index: {}]
  %s2 = inlined_call_operand.hbm [shape: f32[16,128], index: 2, kind: output, shape index: {}]
  %s3 = sld [smem:[#allocation0]]
  $region57: #{tpu_custom_call.1} parent=0
    _
  %s5 = ssub.s32 1, %s3
  %s6 = scalar_select 0, %s5, %s3
  $region1: #{tpu_custom_call.1} parent=0
    #allocation3 [shape = 'u8[8192]{0}', space=vmem, size = 0x2000, scoped, tag = 'input window, operand 0']
    #allocation4 [shape = 's32[2]{0}', space=sflag, size = 0x8, scoped, tag = 'scoped memory for tpu_custom_call.1']
    #allocation5 [shape = 's32[2]{0}', space=sflag, size = 0x8, scoped, tag = 'scoped memory for tpu_custom_call.1']
    #allocation6 [shape = 'u8[8192]{0}', space=vmem, size = 0x2000, scoped, tag = 'input window, operand 1']
    #allocation7 [shape = 's32[2]{0}', space=sflag, size = 0x8, scoped, tag = 'scoped memory for tpu_custom_call.1']
    #allocation8 [shape = 'u8[8192]{0}', space=vmem, size = 0x2000, scoped, tag = 'output window, operand 0']
    %7 = vsyncpa [#allocation4], 0
    %s8 = scalar_lea.sflag [#allocation4], 1
    %9 = vsyncpa %s8, 0
    %10 = vsyncpa [#allocation7], 0
    %s11 = scalar_lea.sflag [#allocation7], 1
    %12 = vsyncpa %s11, 0
    %13 = vsyncpa [#allocation5], 0
    %s14 = scalar_lea.sflag [#allocation5], 1
    %15 = vsyncpa %s14, 0
    loop: start=0, step=1, limit=4
    $region2: #{tpu_custom_call.1} parent=1 // loop_pre_header
      _
    $region3: #{tpu_custom_call.1} parent=1 // loop_header
      %s17 = sphi 0, %s21
      %p18 = scmp.ge.s32.totalorder %s17, 4
      %s24 = sphi 0, %s36
      %s25 = sphi 0, %s32
      %s26 = sphi 0, %s24
      %s27 = sphi 0, %s25
      %s28 = sphi 0, %s26
      %s29 = sphi 0, %s27
      %s41 = sphi 0, %s43
      %s44 = sphi 0, %s41
      %s45 = sphi 0, %s44
      %s61 = sphi 0, %s45
      %s69 = sphi 0, %s71
      %s72 = sphi 0, %s69
      %s73 = sphi 0, %s72
      %s89 = sphi 0, %s73
      %s95 = sphi 0, %s97
      %s98 = sphi 0, %s95
      %s99 = sphi 0, %s98
      %s115 = sphi 0, %s99
    $region4: #{tpu_custom_call.1} parent=1 // loop_header_branch
      %20 = sbr.rel (%p18) target = $region8
    $region5: #{tpu_custom_call.1} parent=1 // loop_body
      %s22 = ssub.s32 %s17, 1
      %s23 = ssub.s32 %s17, 2
      %s30 = sadd.s32 1, %s25
      %p31 = scmp.ge.s32.totalorder %s30, 1
      %s32 = scalar_select %p31, 0, %s30
      %s33 = sadd.s32 1, %s24
      %s34 = scalar_select %p31, %s33, %s24
      %p35 = scmp.ge.s32.totalorder %s34, 2
      %s36 = scalar_select %p35, 0, %s34
      %s37 = sadd.s32 %s24, %s25
      %s38 = sadd.s32 %s36, %s32
      %s39 = ssub.s32 %s37, %s38
      %p40 = scmp.eq.s32.totalorder %s39, 0
      %s42 = sadd.s32 %s41, 1
      %s43 = scalar_select %p40, %s41, %s42
      %p46 = pneg %p40
      %p47 = scmp.eq.s32.totalorder %s17, 1
      %p48 = por %p46, %p47
      %p49 = scmp.ne.s32.totalorder %s41, %s44
      %p50 = scmp.eq.s32.totalorder %s17, 0
      %p51 = por %p49, %p50
      %p52 = scmp.ne.s32.totalorder %s41, %s44
      %p53 = scmp.eq.s32.totalorder %s22, 1
      %p54 = por %p52, %p53
      %p55 = scmp.ne.s32.totalorder %s44, %s45
      %p56 = scmp.eq.s32.totalorder %s22, 0
      %p57 = por %p55, %p56
      %p58 = scmp.ne.s32.totalorder %s44, %s45
      %p59 = scmp.eq.s32.totalorder %s23, 1
      %p60 = por %p58, %p59
      %p62 = scmp.ne.s32.totalorder %s45, %s61
      %p63 = scmp.eq.s32.totalorder %s23, 0
      %p64 = por %p62, %p63
      %s65 = sadd.s32 %s24, %s25
      %s66 = sadd.s32 %s36, %s32
      %s67 = ssub.s32 %s65, %s66
      %p68 = scmp.eq.s32.totalorder %s67, 0
      %s70 = sadd.s32 %s69, 1
      %s71 = scalar_select %p68, %s69, %s70
      %p74 = pneg %p68
      %p75 = scmp.eq.s32.totalorder %s17, 1
      %p76 = por %p74, %p75
      %p77 = scmp.ne.s32.totalorder %s69, %s72
      %p78 = scmp.eq.s32.totalorder %s17, 0
      %p79 = por %p77, %p78
      %p80 = scmp.ne.s32.totalorder %s69, %s72
      %p81 = scmp.eq.s32.totalorder %s22, 1
      %p82 = por %p80, %p81
      %p83 = scmp.ne.s32.totalorder %s72, %s73
      %p84 = scmp.eq.s32.totalorder %s22, 0
      %p85 = por %p83, %p84
      %p86 = scmp.ne.s32.totalorder %s72, %s73
      %p87 = scmp.eq.s32.totalorder %s23, 1
      %p88 = por %p86, %p87
      %p90 = scmp.ne.s32.totalorder %s73, %s89
      %p91 = scmp.eq.s32.totalorder %s23, 0
      %p92 = por %p90, %p91
      %s93 = ssub.s32 %s24, %s36
      %p94 = scmp.eq.s32.totalorder %s93, 0
      %s96 = sadd.s32 %s95, 1
      %s97 = scalar_select %p94, %s95, %s96
      %p100 = pneg %p94
      %p101 = scmp.eq.s32.totalorder %s17, 1
      %p102 = por %p100, %p101
      %p103 = scmp.ne.s32.totalorder %s95, %s98
      %p104 = scmp.eq.s32.totalorder %s17, 0
      %p105 = por %p103, %p104
      %p106 = scmp.ne.s32.totalorder %s95, %s98
      %p107 = scmp.eq.s32.totalorder %s22, 1
      %p108 = por %p106, %p107
      %p109 = scmp.ne.s32.totalorder %s98, %s99
      %p110 = scmp.eq.s32.totalorder %s22, 0
      %p111 = por %p109, %p110
      %p112 = scmp.ne.s32.totalorder %s98, %s99
      %p113 = scmp.eq.s32.totalorder %s23, 1
      %p114 = por %p112, %p113
      %p116 = scmp.ne.s32.totalorder %s99, %s115
      %p117 = scmp.eq.s32.totalorder %s23, 0
      %p118 = por %p116, %p117
      %p119 = scmp.le.s32.totalorder 1, %s17
      %p120 = scmp.lt.s32.totalorder %s17, 3
      %p121 = pnand %p119, %p120
      %p122 = pneg %p121
      // Predicated region
      $region9: #{tpu_custom_call.1} parent=5 // pred_check
        _
      $region10: #{tpu_custom_call.1} parent=5 // pred_check_branch
        %124 = sbr.rel (%p121) target = $region12
      $region11: #{tpu_custom_call.1} parent=5 // pred_region
        %s125 = ssub.s32 %s17, 1
      $region12: #{tpu_custom_call.1} parent=5 // pred_fallthru
        _
      %p126 = scmp.lt.s32.totalorder %s17, 2
      // Predicated region
      $region13: #{tpu_custom_call.1} parent=5 // pred_check
        %p127 = pneg %p126
      $region14: #{tpu_custom_call.1} parent=5 // pred_check_branch
        %129 = sbr.rel (%p127) target = $region16
      $region15: #{tpu_custom_call.1} parent=5 // pred_region
        // Predicated region
        $region17: #{tpu_custom_call.1} parent=15 // pred_check
          %p130 = pneg %p51
        $region18: #{tpu_custom_call.1} parent=15 // pred_check_branch
          %132 = sbr.rel (%p130) target = $region20
        $region19: #{tpu_custom_call.1} parent=15 // pred_region
          %s133 = sand.u32 %s41, 1
          %s134 = scalar_lea.sflag [#allocation4], %s133
          %s135 = sand.u32 %s41, 1
          %s136 = smul.addr %s135, 8
          %s137 = scalar_lea.vmem [#allocation3], %s136
          %s138 = sadd.s32 %s24, %s25
          %140 = vsyncadd %s134, 0
          %s141 = smul.addr %s138, 8
          %s142 = scalar_lea.hbm %s0, %s141
          %s144 = sshll.u32 %s142, 4
          %s145 = int_to_ptr.hbm [resolvable:$true] %s144
          %s146 = sshll.u32 %s137, 4
          %s147 = int_to_ptr.vmem [resolvable:$true] %s146
          %149 = dma.hbm_to_vmem [thread:$0]  %s145, 128, %s147, %s134
        $region20: #{tpu_custom_call.1} parent=15 // pred_fallthru
          _
        // Predicated region
        $region21: #{tpu_custom_call.1} parent=15 // pred_check
          %p150 = pneg %p79
        $region22: #{tpu_custom_call.1} parent=15 // pred_check_branch
          %152 = sbr.rel (%p150) target = $region24
        $region23: #{tpu_custom_call.1} parent=15 // pred_region
          %s153 = sand.u32 %s69, 1
          %s154 = scalar_lea.sflag [#allocation7], %s153
          %s155 = sand.u32 %s69, 1
          %s156 = smul.addr %s155, 8
          %s157 = scalar_lea.vmem [#allocation6], %s156
          %s158 = sadd.s32 %s24, %s25
          %160 = vsyncadd %s154, 0
          %s161 = smul.addr %s158, 8
          %s162 = scalar_lea.hbm %s1, %s161
          %s164 = sshll.u32 %s162, 4
          %s165 = int_to_ptr.hbm [resolvable:$true] %s164
          %s166 = sshll.u32 %s157, 4
          %s167 = int_to_ptr.vmem [resolvable:$true] %s166
          %169 = dma.hbm_to_vmem [thread:$0]  %s165, 128, %s167, %s154
        $region24: #{tpu_custom_call.1} parent=15 // pred_fallthru
          _
      $region16: #{tpu_custom_call.1} parent=5 // pred_fallthru
        _
      %p170 = scmp.le.s32.totalorder 1, %s17
      %p171 = scmp.lt.s32.totalorder %s17, 3
      %p172 = pnand %p170, %p171
      %p173 = pneg %p172
      // Predicated region
      $region25: #{tpu_custom_call.1} parent=5 // pred_check
        _
      $region26: #{tpu_custom_call.1} parent=5 // pred_check_branch
        %175 = sbr.rel (%p172) target = $region28
      $region27: #{tpu_custom_call.1} parent=5 // pred_region
        %s176 = ssub.s32 %s17, 1
        %s177 = sand.u32 %s44, 1
        %s178 = scalar_lea.sflag [#allocation4], %s177
        %s179 = sand.u32 %s44, 1
        %s180 = smul.addr %s179, 8
        %s181 = scalar_lea.vmem [#allocation3], %s180
        // Predicated region
        $region29: #{tpu_custom_call.1} parent=27 // pred_check
          %p182 = pneg %p57
        $region30: #{tpu_custom_call.1} parent=27 // pred_check_branch
          %184 = sbr.rel (%p182) target = $region32
        $region31: #{tpu_custom_call.1} parent=27 // pred_region
          %186 = dma.done %s178, 128
        $region32: #{tpu_custom_call.1} parent=27 // pred_fallthru
          _
        %s187 = sand.u32 %s72, 1
        %s188 = scalar_lea.sflag [#allocation7], %s187
        %s189 = sand.u32 %s72, 1
        %s190 = smul.addr %s189, 8
        %s191 = scalar_lea.vmem [#allocation6], %s190
        // Predicated region
        $region33: #{tpu_custom_call.1} parent=27 // pred_check
          %p192 = pneg %p85
        $region34: #{tpu_custom_call.1} parent=27 // pred_check_branch
          %194 = sbr.rel (%p192) target = $region36
        $region35: #{tpu_custom_call.1} parent=27 // pred_region
          %196 = dma.done %s188, 128
        $region36: #{tpu_custom_call.1} parent=27 // pred_fallthru
          _
        %s197 = sand.u32 %s44, 1
        %s198 = scalar_lea.sflag [#allocation4], %s197
        %s199 = sand.u32 %s44, 1
        %s200 = smul.addr %s199, 8
        %s201 = scalar_lea.vmem [#allocation3], %s200
        %p202 = pneg %p57
        %p203 = pneg %p54
        %s204 = sand.u32 %s72, 1
        %s205 = scalar_lea.sflag [#allocation7], %s204
        %s206 = sand.u32 %s72, 1
        %s207 = smul.addr %s206, 8
        %s208 = scalar_lea.vmem [#allocation6], %s207
        %p209 = pneg %p85
        %p210 = pneg %p82
        %p211 = pneg %p111
        %p212 = pneg %p108
        %s213 = sand.u32 %s98, 1
        %s214 = scalar_lea.sflag [#allocation5], %s213
        %s215 = sand.u32 %s98, 1
        %s216 = smul.addr %s215, 8
        %s217 = scalar_lea.vmem [#allocation8], %s216
        %s218 = sadd.s32 %s26, %s27
        %s219 = sadd.s32 %s26, %s27
        %p220 = scmp.eq.s32.totalorder %s27, 0
        // Predicated region
        $region37: #{tpu_custom_call.1} parent=27 // pred_check
          %p221 = pneg %p220
        $region38: #{tpu_custom_call.1} parent=27 // pred_check_branch
          %223 = sbr.rel (%p221) target = $region40
        $region39: #{tpu_custom_call.1} parent=27 // pred_region
          %224 = vst [vmem:[#allocation2] sm:$0xff] 0.0
        $region40: #{tpu_custom_call.1} parent=27 // pred_fallthru
          _
        %v225 = vld [vmem:[%s181] sm:$0xff]
        %v226 = vmul.f32 %v225, 0.25
        %v227 = vld [vmem:[%s191] sm:$0xff]
        %v228 = vmul.f32 %v227, 0.25
        %229 = vmax.xlane.f32.xlu0 %v226
        %v230 = vpop.xlane.xlu0 %229
        %v231 = vsub.f32 %v226, %v230
        %232 = vmax.xlane.f32.xlu0 %v228
        %v233 = vpop.xlane.xlu0 %232
        %v234 = vsub.f32 %v228, %v233
        %v235 = vmul.f32 %v231, 1.442695
        %v236 = vpow.pop %v235
        %v237 = vmul.f32 %v234, 1.442695
        %v238 = vpow.pop %v237
        %239 = vadd.xlane.f32.xlu0 %v236
        %v240 = vpop.xlane.xlu0 %239
        %241 = vadd.xlane.f32.xlu0 %v238
        %v242 = vpop.xlane.xlu0 %241
        %v243 = vlog2.pop %v240
        %v244 = vmul.f32 %v243, 0.6931472
        %v245 = vsub.f32 %v231, %v244
        %v246 = vlog2.pop %v242
        %v247 = vmul.f32 %v246, 0.6931472
        %v248 = vsub.f32 %v234, %v247
        %v249 = vrcp.pop %v242
        %v250 = vmul.f32 %v242, %v249
        %v251 = vsub.f32 1.0, %v250
        %v252 = vmul.f32 %v249, %v251
        %v253 = vadd.f32 %v249, %v252
        %vm254 = vweird.f32 %v242
        %vm255 = vweird.f32 %v249
        %vm256 = vmor %vm254, %vm255
        %v257 = vsel %vm256, %v249, %v253
        %v258 = vand.u32 2147483647, %v242
        %vm259 = vcmp.eq.f32.partialorder %v258, 8.507059e+37
        %v260 = vand.u32 %v242, 2147483648
        %v261 = vor.u32 1.1754944e-38, %v260
        %v262 = vsel %vm259, %v261, %v257
        %v263 = vmul.f32 %v238, %v262
        %v264 = vld [vmem:[#allocation2] sm:$0xff]
        %v265 = vsub.f32 %v248, %v245
        %v266 = vmul.f32 %v263, %v265
        %v267 = vadd.f32 %v264, %v266
        %268 = vst [vmem:[#allocation2] sm:$0xff] %v267
        // Predicated region
        $region41: #{tpu_custom_call.1} parent=27 // pred_check
          %p269 = pneg %p220
        $region42: #{tpu_custom_call.1} parent=27 // pred_check_branch
          %271 = sbr.rel (%p269) target = $region44
        $region43: #{tpu_custom_call.1} parent=27 // pred_region
          %v272 = vld [vmem:[#allocation2] sm:$0xff]
          %273 = vadd.xlane.f32.xlu0 %v272
          %v274 = vpop.xlane.xlu0 %273
          %v275 = vrot.slane %v274, 4
          %v276 = vadd.f32 %v274, %v275
          %v277 = vrot.slane %v276, 2
          %v278 = vadd.f32 %v276, %v277
          %v279 = vrot.slane %v278, 1
          %v280 = vadd.f32 %v278, %v279
          %s281 = vtos %v280
          %v282 = vstv %s281
          %283 = vst [vmem:[%s217] sm:$0xff] %v282
        $region44: #{tpu_custom_call.1} parent=27 // pred_fallthru
          _
        %s284 = sand.u32 %s98, 1
        %s285 = scalar_lea.sflag [#allocation5], %s284
        %s286 = sand.u32 %s98, 1
        %s287 = smul.addr %s286, 8
        %s288 = scalar_lea.vmem [#allocation8], %s287
        // Predicated region
        $region45: #{tpu_custom_call.1} parent=27 // pred_check
          %p289 = pneg %p108
        $region46: #{tpu_custom_call.1} parent=27 // pred_check_branch
          %291 = sbr.rel (%p289) target = $region48
        $region47: #{tpu_custom_call.1} parent=27 // pred_region
          %293 = vsyncadd %s285, 0
          %s294 = smul.addr %s26, 8
          %s295 = scalar_lea.hbm %s2, %s294
          %s297 = sshll.u32 %s288, 4
          %s298 = int_to_ptr.vmem [resolvable:$true] %s297
          %s299 = sshll.u32 %s295, 4
          %s300 = int_to_ptr.hbm [resolvable:$true] %s299
          %302 = dma.vmem_to_hbm [thread:$0]  %s298, 128, %s300, %s285
        $region48: #{tpu_custom_call.1} parent=27 // pred_fallthru
          _
      $region28: #{tpu_custom_call.1} parent=5 // pred_fallthru
        _
      %p303 = scmp.le.s32.totalorder 2, %s17
      // Predicated region
      $region49: #{tpu_custom_call.1} parent=5 // pred_check
        %p304 = pneg %p303
      $region50: #{tpu_custom_call.1} parent=5 // pred_check_branch
        %306 = sbr.rel (%p304) target = $region52
      $region51: #{tpu_custom_call.1} parent=5 // pred_region
        %s307 = ssub.s32 %s17, 2
        // Predicated region
        $region53: #{tpu_custom_call.1} parent=51 // pred_check
          %p308 = pneg %p114
        $region54: #{tpu_custom_call.1} parent=51 // pred_check_branch
          %310 = sbr.rel (%p308) target = $region56
        $region55: #{tpu_custom_call.1} parent=51 // pred_region
          %s311 = sand.u32 %s99, 1
          %s312 = scalar_lea.sflag [#allocation5], %s311
          %s313 = sand.u32 %s99, 1
          %s314 = smul.addr %s313, 8
          %s315 = scalar_lea.vmem [#allocation8], %s314
          %317 = dma.done %s312, 128
        $region56: #{tpu_custom_call.1} parent=51 // pred_fallthru
          _
      $region52: #{tpu_custom_call.1} parent=5 // pred_fallthru
        _
    $region6: #{tpu_custom_call.1} parent=1 // loop_footer
      %s21 = sadd.s32 1, %s17
    $region7: #{tpu_custom_call.1} parent=1 // loop_footer_branch
      %16 = sbr.rel target = $region3
    $region8: #{tpu_custom_call.1} parent=1 // loop_exit
      _
    %318 = vsyncpa [#allocation4], 1
    %s319 = scalar_lea.sflag [#allocation4], 1
    %320 = vsyncpa %s319, 1
    %321 = vsyncpa [#allocation7], 1
    %s322 = scalar_lea.sflag [#allocation7], 1
    %323 = vsyncpa %s322, 1
    %324 = vsyncpa [#allocation5], 1
    %s325 = scalar_lea.sflag [#allocation5], 1
    %326 = vsyncpa %s325, 1

</llo_original>
